<compile_context>
chip_gen: v5e
topology: v5e:2x2
jax: 0.10.0
libtpu: 0.0.40
codegen_flags: <defaults>
</compile_context>

<pallas_src>
import jax
import jax.numpy as jnp
from jax import lax
from jax.experimental import pallas as pl
from jax.experimental.pallas import tpu as pltpu

BN_EPS = 1e-5


# ---------------------------------------------------------------------------
# Hardware-aware sizing helpers
# ---------------------------------------------------------------------------
_VMEM_CAP = None


def _vmem_capacity_bytes():
    """Per-core VMEM capacity (fallback: 64 MiB, the smallest of v5e/v6e/v7x)."""
    global _VMEM_CAP
    if _VMEM_CAP is None:
        try:
            cap = int(pltpu.get_tpu_info().vmem_capacity_bytes)
        except Exception:
            cap = 0
        _VMEM_CAP = cap if cap >= 64 * 1024 * 1024 else 64 * 1024 * 1024
    return _VMEM_CAP


def _pick_td(Do, Ho, Wo, C, budget):
    """Largest D-tile whose VMEM working set (with conservative lane padding) fits `budget`."""
    Hp, Wp = Ho + 4, Wo + 4
    c_pad = max(C, 128)  # minor-dim lane padding for small channel counts

    def usage(td):
        xbuf = 2 * (td + 4) * Hp * Wp * c_pad * 2       # bf16 halo slabs (double buffered)
        wgt = 2 * 125 * max(C, 16) * c_pad * 2          # bf16 weight block (double buffered)
        io = 4 * td * Ho * Wo * c_pad * 4               # out + residual blocks (2 buffers each)
        acc = 3 * td * Ho * Wo * c_pad * 4              # f32 accumulator + temporaries
        return xbuf + wgt + io + acc

    td = max(1, min(Do, 32))
    while td > 1 and usage(td) > budget:
        td = max(1, td // 2)
    return td


# ---------------------------------------------------------------------------
# Kernel 1: fused matmul + folded-bias/BN + ELU (used for the ConvTranspose upsample)
# ---------------------------------------------------------------------------
def _fused_matmul_bn_elu_kernel(x_ref, w_ref, scale_ref, shift_ref, o_ref):
    z = jnp.dot(x_ref[...], w_ref[...], preferred_element_type=jnp.float32)
    z = z * scale_ref[...] + shift_ref[...]
    o_ref[...] = jnp.where(z > 0, z, jnp.exp(z) - 1.0)   # ELU


def fused_matmul_bn_elu(x, w, scale, shift, *, tm_max=512):
    """o = ELU((x @ w) * scale + shift).  x:(M,K), w:(K,Nc).  bf16 operands, f32 epilogue."""
    M, K = x.shape
    Nc = w.shape[1]
    if M <= tm_max:
        tm, Mp = M, M
    else:
        tm = tm_max
        Mp = -(-M // tm) * tm
    xp = x if Mp == M else jnp.pad(x, ((0, Mp - M), (0, 0)))   # ragged M: pad, slice after
    scale2 = scale.reshape(1, Nc).astype(jnp.float32)
    shift2 = shift.reshape(1, Nc).astype(jnp.float32)
    out = pl.pallas_call(
        _fused_matmul_bn_elu_kernel,
        out_shape=jax.ShapeDtypeStruct((Mp, Nc), jnp.float32),
        grid=(Mp // tm,),
        in_specs=[
            pl.BlockSpec((tm, K), lambda i: (i, 0)),
            pl.BlockSpec((K, Nc), lambda i: (0, 0)),
            pl.BlockSpec((1, Nc), lambda i: (0, 0)),
            pl.BlockSpec((1, Nc), lambda i: (0, 0)),
        ],
        out_specs=pl.BlockSpec((tm, Nc), lambda i: (i, 0)),
        compiler_params=pltpu.CompilerParams(dimension_semantics=("parallel",)),
    )(xp.astype(jnp.bfloat16), w.astype(jnp.bfloat16), scale2, shift2)
    return out[:M]


# ---------------------------------------------------------------------------
# Kernel 2: halo-tiled Conv3d(k=5, 'same') + folded-bias/BN + ELU (+ optional fused residual)
# ---------------------------------------------------------------------------
def _make_conv_kernel(td, Ho, Wo, C, n_dt, fuse_residual):
    M2 = td * Ho * Wo

    def kernel(x_hbm, w_ref, scale_ref, shift_ref, *rest):
        if fuse_residual:
            res_ref, o_ref, xbuf, sem, acc_ref = rest
        else:
            o_ref, xbuf, sem, acc_ref = rest

        n = pl.program_id(0)
        dt = pl.program_id(1)
        cur = dt & 1

        def halo_copy(d_idx, slot):
            return pltpu.make_async_copy(
                x_hbm.at[n, pl.ds(d_idx * td, td + 4)],   # (td+4, Ho+4, Wo+4, C) slab
                xbuf.at[slot],
                sem.at[slot])

        # Prime the pipeline at the start of each sequential D sweep.
        @pl.when(dt == 0)
        def _():
            halo_copy(0, 0).start()

        halo_copy(dt, cur).wait()

        # Prefetch the next D tile while computing on the current one.
        @pl.when(dt + 1 < n_dt)
        def _():
            halo_copy(dt + 1, 1 - cur).start()

        acc_ref[...] = jnp.zeros_like(acc_ref)
        xfull = xbuf[cur]                                  # (td+4, Ho+4, Wo+4, C) bf16
        for kd in range(5):
            for kh in range(5):
                xplane = xfull[kd:kd + td, kh:kh + Ho]     # (td, Ho, Wo+4, C)
                for kw in range(5):
                    xs = xplane[:, :, kw:kw + Wo, :].reshape(M2, C)
                    acc_ref[...] += jnp.dot(xs, w_ref[kd, kh, kw],
                                            preferred_element_type=jnp.float32)

        z = acc_ref[...] * scale_ref[...] + shift_ref[...]  # folded conv-bias + BN
        a = jnp.where(z > 0, z, jnp.exp(z) - 1.0)           # ELU
        if fuse_residual:
            r = a + res_ref[...].reshape(M2, C)
            a = jnp.where(r > 0, r, jnp.exp(r) - 1.0)       # ELU(conv_out + cat)
        o_ref[...] = a.reshape(o_ref.shape).astype(o_ref.dtype)

    return kernel


def conv_bn_elu_samepad5(x, w5, scale, shift, residual=None, *, out_dtype=jnp.float32):
    """'same' Conv3d(k=5) + folded-BN + ELU on NDHWC `x`, optionally fused with the
    residual epilogue ELU(conv_out + residual).  x:(N,Do,Ho,Wo,C), w5:(5,5,5,Cin,Cout)."""
    N, Do, Ho, Wo, C = x.shape
    cap = _vmem_capacity_bytes()
    td = _pick_td(Do, Ho, Wo, C, budget=cap // 2)
    n_dt = -(-Do // td)
    Do_pad = n_dt * td
    Hp, Wp = Ho + 4, Wo + 4

    # Zero halo (+2 each side) + D tail pad, fused with the bf16 operand cast (one XLA pass).
    xp = jnp.pad(x, ((0, 0), (2, 2 + Do_pad - Do), (2, 2), (2, 2), (0, 0))).astype(jnp.bfloat16)
    wb = w5.astype(jnp.bfloat16)
    scale2 = scale.reshape(1, C).astype(jnp.float32)
    shift2 = shift.reshape(1, C).astype(jnp.float32)

    in_specs = [
        pl.BlockSpec(memory_space=pl.ANY),                            # halo'd input: manual DMA
        pl.BlockSpec((5, 5, 5, C, C), lambda n, d: (0, 0, 0, 0, 0)),  # full weight block
        pl.BlockSpec((1, C), lambda n, d: (0, 0)),
        pl.BlockSpec((1, C), lambda n, d: (0, 0)),
    ]
    args = [xp, wb, scale2, shift2]
    fuse_res = residual is not None
    if fuse_res:
        resp = residual.astype(jnp.float32)
        if Do_pad != Do:
            resp = jnp.pad(resp, ((0, 0), (0, Do_pad - Do), (0, 0), (0, 0), (0, 0)))
        in_specs.append(pl.BlockSpec((1, td, Ho, Wo, C), lambda n, d: (n, d, 0, 0, 0)))
        args.append(resp)

    out = pl.pallas_call(
        _make_conv_kernel(td, Ho, Wo, C, n_dt, fuse_res),
        out_shape=jax.ShapeDtypeStruct((N, Do_pad, Ho, Wo, C), out_dtype),
        grid=(N, n_dt),
        in_specs=in_specs,
        out_specs=pl.BlockSpec((1, td, Ho, Wo, C), lambda n, d: (n, d, 0, 0, 0)),
        scratch_shapes=[
            pltpu.VMEM((2, td + 4, Hp, Wp, C), jnp.bfloat16),   # double-buffered halo slab
            pltpu.SemaphoreType.DMA((2,)),
            pltpu.VMEM((td * Ho * Wo, C), jnp.float32),         # f32 accumulator
        ],
        compiler_params=pltpu.CompilerParams(
            dimension_semantics=("parallel", "arbitrary"),
            vmem_limit_bytes=int(cap * 3 // 4),
        ),
    )(*args)
    return out[:, :Do]


# ---------------------------------------------------------------------------
# Parameters (deterministic, synthetic)
# ---------------------------------------------------------------------------
def init_params(key, in_channel, out_channel, n_convs):
    cmid = out_channel // 2
    keys = iter(jax.random.split(key, 6 + n_convs * 6))
    p = {
        "up_w": 0.1 * jax.random.normal(next(keys), (in_channel, cmid, 2, 2, 2), jnp.float32),
        "up_b": 0.1 * jax.random.normal(next(keys), (cmid,), jnp.float32),
        "bn1_gamma": 1.0 + 0.1 * jax.random.normal(next(keys), (cmid,), jnp.float32),
        "bn1_beta": 0.1 * jax.random.normal(next(keys), (cmid,), jnp.float32),
        "bn1_mean": 0.1 * jax.random.normal(next(keys), (cmid,), jnp.float32),
        "bn1_var": jax.random.uniform(next(keys), (cmid,), jnp.float32, 0.5, 1.5),
        "convs": [],
    }
    for _ in range(n_convs):
        p["convs"].append({
            "w": 0.05 * jax.random.normal(next(keys), (out_channel, out_channel, 5, 5, 5), jnp.float32),
            "b": 0.1 * jax.random.normal(next(keys), (out_channel,), jnp.float32),
            "gamma": 1.0 + 0.1 * jax.random.normal(next(keys), (out_channel,), jnp.float32),
            "beta": 0.1 * jax.random.normal(next(keys), (out_channel,), jnp.float32),
            "mean": 0.1 * jax.random.normal(next(keys), (out_channel,), jnp.float32),
            "var": jax.random.uniform(next(keys), (out_channel,), jnp.float32, 0.5, 1.5),
        })
    return p


# ---------------------------------------------------------------------------
# decode_layer forward (Pallas kernels for all hot-path compute)
# ---------------------------------------------------------------------------
def decode_layer_forward(params, img, skiped_img):
    # img: (N, Cin, D, H, W), skiped_img: (N, Cout//2, 2D, 2H, 2W)  (PyTorch NCDHW)
    N, Cin, D, H, W = img.shape
    x = jnp.transpose(img, (0, 2, 3, 4, 1)).astype(jnp.float32)          # NDHWC
    skip = jnp.transpose(skiped_img, (0, 2, 3, 4, 1)).astype(jnp.float32)
    cmid = params["up_b"].shape[0]

    # --- ConvTranspose3d(k=2, s=2) + BN1 + ELU as one fused Pallas matmul over voxels ---
    # out[n, 2d+kd, 2h+kh, 2w+kw, co] = sum_ci x[n,d,h,w,ci] * W[ci,co,kd,kh,kw] + b[co]
    s1 = params["bn1_gamma"] / jnp.sqrt(params["bn1_var"] + BN_EPS)
    t1 = params["bn1_beta"] - params["bn1_mean"] * s1
    w_up = jnp.transpose(params["up_w"], (0, 2, 3, 4, 1)).reshape(Cin, 8 * cmid)
    scale_up = jnp.tile(s1, 8)                      # per-column (kd,kh,kw,co) scale
    shift_up = jnp.tile(params["up_b"] * s1 + t1, 8)
    y = fused_matmul_bn_elu(x.reshape(N * D * H * W, Cin), w_up, scale_up, shift_up)
    # depth-to-space back to NDHWC (one XLA pass)
    # TODO(synk): could be folded into the first conv's halo DMA to save one HBM round-trip.
    y = y.reshape(N, D, H, W, 2, 2, 2, cmid)
    y = jnp.transpose(y, (0, 1, 4, 2, 5, 3, 6, 7)).reshape(N, 2 * D, 2 * H, 2 * W, cmid)

    # --- concat with skip connection along channels (f32: also the residual input) -----
    cat = jnp.concatenate([y, skip], axis=-1)       # (N, 2D, 2H, 2W, Cout)
    n_convs = len(params["convs"])

    # --- nConvs x [Conv3d(k=5,'same') + BN + ELU], halo-tiled Pallas kernels ------------
    out = cat
    for i, c in enumerate(params["convs"]):
        w5 = jnp.transpose(c["w"], (2, 3, 4, 1, 0))            # (kd, kh, kw, Cin, Cout)
        s = c["gamma"] / jnp.sqrt(c["var"] + BN_EPS)
        t = c["beta"] - c["mean"] * s
        last = (i == n_convs - 1)
        out = conv_bn_elu_samepad5(
            out, w5, s, c["b"] * s + t,
            residual=cat if last else None,                    # fuse ELU(. + cat) into last conv
            out_dtype=jnp.float32 if last else jnp.bfloat16)   # bf16 intermediates: 2x less HBM
    if n_convs == 0:
        # TODO(synk): degenerate nConvs==0 config kept in plain JAX (not on the hot path).
        z = cat + cat
        out = jnp.where(z > 0, z, jnp.exp(z) - 1.0)

    return jnp.transpose(out, (0, 4, 1, 2, 3))                 # back to NCDHW


# ---------------------------------------------------------------------------
# Pure-JAX reference (mirrors the kernels' bf16-operand / f32-accumulate numerics)
# ---------------------------------------------------------------------------
def reference_forward(params, img, skiped_img):
    def elu(v):
        return jnp.where(v > 0, v, jnp.exp(v) - 1.0)

    N, Cin, D, H, W = img.shape
    x = jnp.transpose(img, (0, 2, 3, 4, 1)).astype(jnp.float32)
    skip = jnp.transpose(skiped_img, (0, 2, 3, 4, 1)).astype(jnp.float32)
    cmid = params["up_b"].shape[0]

    y = jnp.einsum('ndhwi,iopqr->ndhwpqro',
                   x.astype(jnp.bfloat16), params["up_w"].astype(jnp.bfloat16),
                   preferred_element_type=jnp.float32)
    y = jnp.transpose(y, (0, 1, 4, 2, 5, 3, 6, 7)).reshape(N, 2 * D, 2 * H, 2 * W, cmid)
    y = y + params["up_b"]
    s1 = params["bn1_gamma"] / jnp.sqrt(params["bn1_var"] + BN_EPS)
    y = elu((y - params["bn1_mean"]) * s1 + params["bn1_beta"])

    cat = jnp.concatenate([y, skip], axis=-1)
    out = cat
    for c in params["convs"]:
        w = jnp.transpose(c["w"], (2, 3, 4, 1, 0)).astype(jnp.bfloat16)   # DHWIO
        z = lax.conv_general_dilated(out.astype(jnp.bfloat16), w, (1, 1, 1), 'SAME',
                                     dimension_numbers=('NDHWC', 'DHWIO', 'NDHWC'),
                                     preferred_element_type=jnp.float32)
        z = z + c["b"]
        s = c["gamma"] / jnp.sqrt(c["var"] + BN_EPS)
        out = elu((z - c["mean"]) * s + c["beta"])
    out = elu(out + cat)
    return jnp.transpose(out, (0, 4, 1, 2, 3))


if __name__ == "__main__":
    key = jax.random.PRNGKey(0)
    k_img, k_skip, k_param = jax.random.split(key, 3)

    N, Cin, Cout, D, n_convs = 2, 4, 8, 4, 2
    img = jax.random.normal(k_img, (N, Cin, D, D, D), jnp.float32)
    skip = jax.random.normal(k_skip, (N, Cout // 2, 2 * D, 2 * D, 2 * D), jnp.float32)
    params = init_params(k_param, Cin, Cout, n_convs)

    out = jax.block_until_ready(decode_layer_forward(params, img, skip))
    ref = jax.block_until_ready(reference_forward(params, img, skip))

    assert out.shape == (N, Cout, 2 * D, 2 * D, 2 * D), out.shape
    max_err = float(jnp.max(jnp.abs(out - ref)))
    # bf16 matmul operands (mirrored in the reference) -> keep a bf16-appropriate tolerance.
    assert jnp.allclose(out, ref, atol=1e-2, rtol=1e-2), f"max_err={max_err}"
    print("KERNEL_OK")
</pallas_src>

<mosaic_0001>
module attributes {stable_mosaic.version = 11 : i64} {
  func.func @_fused_matmul_bn_elu_kernel(%arg0: i32, %arg1: memref<128x4xbf16, #tpu.memory_space<vmem>>, %arg2: memref<4x32xbf16, #tpu.memory_space<vmem>>, %arg3: memref<1x32xf32, #tpu.memory_space<vmem>>, %arg4: memref<1x32xf32, #tpu.memory_space<vmem>>, %arg5: memref<128x32xf32, #tpu.memory_space<vmem>>) attributes {dimension_semantics = [#tpu.dimension_semantics<parallel>], iteration_bounds = array<i64: 1>, scalar_prefetch = 0 : i64, scratch_operands = 0 : i64, tpu.core_type = #tpu.core_type<tc>, window_params = [{transform_indices = @transform_0, window_bounds = array<i64: 128, 4>}, {pipeline_mode = #tpu.pipeline_mode<synchronous>, transform_indices = @transform_1, window_bounds = array<i64: 4, 32>}, {pipeline_mode = #tpu.pipeline_mode<synchronous>, transform_indices = @transform_2, window_bounds = array<i64: 1, 32>}, {pipeline_mode = #tpu.pipeline_mode<synchronous>, transform_indices = @transform_3, window_bounds = array<i64: 1, 32>}, {transform_indices = @transform_4, window_bounds = array<i64: 128, 32>}]} {
    %c0 = arith.constant 0 : index
    %c0_0 = arith.constant 0 : index
    %0 = vector.load %arg1[%c0, %c0_0] : memref<128x4xbf16, #tpu.memory_space<vmem>>, vector<128x4xbf16>
    %c0_1 = arith.constant 0 : index
    %c0_2 = arith.constant 0 : index
    %1 = vector.load %arg2[%c0_1, %c0_2] : memref<4x32xbf16, #tpu.memory_space<vmem>>, vector<4x32xbf16>
    %cst = arith.constant dense<0.000000e+00> : vector<128x32xf32>
    %2 = tpu.matmul %0, %1, %cst {dimension_numbers = #tpu.dot_dimension_numbers<[1], [0], [0], [1], [0, 0, 1, 1], [], []>} : vector<128x4xbf16>, vector<4x32xbf16>, vector<128x32xf32> -> vector<128x32xf32>
    %c0_3 = arith.constant 0 : index
    %c0_4 = arith.constant 0 : index
    %3 = vector.load %arg3[%c0_3, %c0_4] : memref<1x32xf32, #tpu.memory_space<vmem>>, vector<1x32xf32>
    %4 = vector.broadcast %3 : vector<1x32xf32> to vector<128x32xf32>
    %5 = arith.mulf %2, %4 : vector<128x32xf32>
    %c0_5 = arith.constant 0 : index
    %c0_6 = arith.constant 0 : index
    %6 = vector.load %arg4[%c0_5, %c0_6] : memref<1x32xf32, #tpu.memory_space<vmem>>, vector<1x32xf32>
    %7 = vector.broadcast %6 : vector<1x32xf32> to vector<128x32xf32>
    %8 = arith.addf %5, %7 : vector<128x32xf32>
    %cst_7 = arith.constant 0.000000e+00 : f32
    %9 = vector.broadcast %cst_7 : f32 to vector<128x32xf32>
    %10 = arith.cmpf ogt, %8, %9 : vector<128x32xf32>
    %11 = math.exp %8 : vector<128x32xf32>
    %cst_8 = arith.constant 1.000000e+00 : f32
    %12 = vector.broadcast %cst_8 : f32 to vector<128x32xf32>
    %13 = arith.subf %11, %12 : vector<128x32xf32>
    %14 = arith.select %10, %8, %13 : vector<128x32xi1>, vector<128x32xf32>
    %c0_9 = arith.constant 0 : index
    %c0_10 = arith.constant 0 : index
    %15 = vector.load %arg5[%c0_9, %c0_10] : memref<128x32xf32, #tpu.memory_space<vmem>>, vector<128x32xf32>
    tpu.vector_store %arg5[%c0_9, %c0_10], %14 {strides = array<i32>} : memref<128x32xf32, #tpu.memory_space<vmem>>, vector<128x32xf32>,
    return
  }
  func.func @transform_0(%arg0: i32) -> (i32, i32) {
    %c0_i32 = arith.constant 0 : i32
    %c0_i32_0 = arith.constant 0 : i32
    return %arg0, %c0_i32 : i32, i32
  }
  func.func @transform_1(%arg0: i32) -> (i32, i32) {
    %c0_i32 = arith.constant 0 : i32
    %c0_i32_0 = arith.constant 0 : i32
    %c0_i32_1 = arith.constant 0 : i32
    return %c0_i32, %c0_i32_0 : i32, i32
  }
  func.func @transform_2(%arg0: i32) -> (i32, i32) {
    %c0_i32 = arith.constant 0 : i32
    %c0_i32_0 = arith.constant 0 : i32
    %c0_i32_1 = arith.constant 0 : i32
    return %c0_i32, %c0_i32_0 : i32, i32
  }
  func.func @transform_3(%arg0: i32) -> (i32, i32) {
    %c0_i32 = arith.constant 0 : i32
    %c0_i32_0 = arith.constant 0 : i32
    %c0_i32_1 = arith.constant 0 : i32
    return %c0_i32, %c0_i32_0 : i32, i32
  }
  func.func @transform_4(%arg0: i32) -> (i32, i32) {
    %c0_i32 = arith.constant 0 : i32
    %c0_i32_0 = arith.constant 0 : i32
    return %arg0, %c0_i32 : i32, i32
  }
}

</mosaic_0001>

<llo_original>
// kernel: tpu_custom_call.1
$region0: #{tpu_custom_call.1}
  #allocation0 [shape = 'u32[]', space=smem, size = 0x4, offset = 0x4, fixed_abs, tag = 'smem constant byte address 0x4 - core index']
  #allocation1 [shape = 'u32[72,128]{1,0:T(1,128)}', space=vmem, size = 0x9000, scoped, tag = 'internal scratch']
  %s0 = inlined_call_operand.vmem [shape: bf16[128,4], index: 0, kind: input, shape index: {}]
  %s1 = inlined_call_operand.vmem [shape: bf16[4,32], index: 1, kind: input, shape index: {}]
  %s2 = inlined_call_operand.vmem [shape: f32[1,32], index: 2, kind: input, shape index: {}]
  %s3 = inlined_call_operand.vmem [shape: f32[1,32], index: 3, kind: input, shape index: {}]
  %s4 = inlined_call_operand.vmem [shape: f32[128,32], index: 4, kind: output, shape index: {}]
  %s5 = sld [smem:[#allocation0]]
  $region26: #{tpu_custom_call.1} parent=0
    _
  %s7 = ssub.s32 1, %s5
  %s8 = scalar_select 0, %s7, %s5
  // Predicated region
  $region2: #{tpu_custom_call.1} parent=0 // pred_check
    _
  $region3: #{tpu_custom_call.1} parent=0 // pred_check_branch
    %10 = sbr.rel (0) target = $region5
  $region4: #{tpu_custom_call.1} parent=0 // pred_region
    _
  $region5: #{tpu_custom_call.1} parent=0 // pred_fallthru
    _
  // Predicated region
  $region6: #{tpu_custom_call.1} parent=0 // pred_check
    _
  $region7: #{tpu_custom_call.1} parent=0 // pred_check_branch
    %12 = sbr.rel (0) target = $region9
  $region8: #{tpu_custom_call.1} parent=0 // pred_region
    _
  $region9: #{tpu_custom_call.1} parent=0 // pred_fallthru
    _
  // Predicated region
  $region10: #{tpu_custom_call.1} parent=0 // pred_check
    _
  $region11: #{tpu_custom_call.1} parent=0 // pred_check_branch
    %14 = sbr.rel (0) target = $region13
  $region12: #{tpu_custom_call.1} parent=0 // pred_region
    _
  $region13: #{tpu_custom_call.1} parent=0 // pred_fallthru
    _
  // Predicated region
  $region14: #{tpu_custom_call.1} parent=0 // pred_check
    _
  $region15: #{tpu_custom_call.1} parent=0 // pred_check_branch
    %16 = sbr.rel (0) target = $region17
  $region16: #{tpu_custom_call.1} parent=0 // pred_region
    _
  $region17: #{tpu_custom_call.1} parent=0 // pred_fallthru
    _
  %v18 = vld [vmem:[%s0] sm:$0xf]
  %v19 = vld [vmem:[%s0 + $0x4] sm:$0xf]
  %v20 = vld [vmem:[%s0 + $0x8] sm:$0xf]
  %v21 = vld [vmem:[%s0 + $0xc] sm:$0xf]
  %v22 = vld [vmem:[%s0 + $0x10] sm:$0xf]
  %v23 = vld [vmem:[%s0 + $0x14] sm:$0xf]
  %v24 = vld [vmem:[%s0 + $0x18] sm:$0xf]
  %v25 = vld [vmem:[%s0 + $0x1c] sm:$0xf]
  %v26 = vld [vmem:[%s0 + $0x20] sm:$0xf]
  %v27 = vld [vmem:[%s0 + $0x24] sm:$0xf]
  %v28 = vld [vmem:[%s0 + $0x28] sm:$0xf]
  %v29 = vld [vmem:[%s0 + $0x2c] sm:$0xf]
  %v30 = vld [vmem:[%s0 + $0x30] sm:$0xf]
  %v31 = vld [vmem:[%s0 + $0x34] sm:$0xf]
  %v32 = vld [vmem:[%s0 + $0x38] sm:$0xf]
  %v33 = vld [vmem:[%s0 + $0x3c] sm:$0xf]
  %v34 = vld [vmem:[%s1] sm:$0x3]
  %v51 = vunpack.c.l.b16 %v18
  %v52 = vunpack.c.l.b16 %v19
  %v53 = vunpack.c.l.b16 %v20
  %v54 = vunpack.c.l.b16 %v21
  %v55 = vunpack.c.l.b16 %v22
  %v56 = vunpack.c.l.b16 %v23
  %v57 = vunpack.c.l.b16 %v24
  %v58 = vunpack.c.l.b16 %v25
  %v59 = vunpack.c.l.b16 %v26
  %v60 = vunpack.c.l.b16 %v27
  %v61 = vunpack.c.l.b16 %v28
  %v62 = vunpack.c.l.b16 %v29
  %v63 = vunpack.c.l.b16 %v30
  %v64 = vunpack.c.l.b16 %v31
  %v65 = vunpack.c.l.b16 %v32
  %v66 = vunpack.c.l.b16 %v33
  %v67 = vpack.c.b16 %v52, %v51
  %v68 = vpack.c.b16 %v54, %v53
  %v69 = vpack.c.b16 %v56, %v55
  %v70 = vpack.c.b16 %v58, %v57
  %v71 = vpack.c.b16 %v60, %v59
  %v72 = vpack.c.b16 %v62, %v61
  %v73 = vpack.c.b16 %v64, %v63
  %v74 = vpack.c.b16 %v66, %v65
  %vm75 = vcmask 31744
  %v77 = vsel %vm75, %v67, 0
  %v80 = vsel %vm75, %v68, 0
  %v83 = vsel %vm75, %v69, 0
  %v86 = vsel %vm75, %v70, 0
  %v89 = vsel %vm75, %v71, 0
  %v92 = vsel %vm75, %v72, 0
  %v95 = vsel %vm75, %v73, 0
  %v98 = vsel %vm75, %v74, 0
  %vm100 = vcmask 1041408
  %v102 = vsel %vm100, %v34, 0
  %104 = vmatpush.bf16.msra.mxu0 0
  %105 = vmatpush.bf16.msra.mxu0 0
  %106 = vmatpush.bf16.msra.mxu0 0
  %107 = vmatpush.bf16.msra.mxu0 0
  %108 = vmatpush.bf16.msra.mxu0 0
  %109 = vmatpush.bf16.msra.mxu0 0
  %110 = vmatpush.bf16.msra.mxu0 0
  %111 = vmatpush.bf16.msra.mxu0 %v102
  %112 = vmatmul.bf16.gmra.mxu0 %v77
  %v113 = vpop.f32.mrf.mxu0
  %v114 = vadd.f32 0.0, %v113
  %v115 = vpop.f32.mrf.mxu0
  %v116 = vadd.f32 0.0, %v115
  %117 = vmatmul.bf16.gmra.mxu0 %v80
  %v118 = vpop.f32.mrf.mxu0
  %v119 = vadd.f32 0.0, %v118
  %v120 = vpop.f32.mrf.mxu0
  %v121 = vadd.f32 0.0, %v120
  %122 = vmatmul.bf16.gmra.mxu0 %v83
  %v123 = vpop.f32.mrf.mxu0
  %v124 = vadd.f32 0.0, %v123
  %v125 = vpop.f32.mrf.mxu0
  %v126 = vadd.f32 0.0, %v125
  %127 = vmatmul.bf16.gmra.mxu0 %v86
  %v128 = vpop.f32.mrf.mxu0
  %v129 = vadd.f32 0.0, %v128
  %v130 = vpop.f32.mrf.mxu0
  %v131 = vadd.f32 0.0, %v130
  %132 = vmatmul.bf16.gmra.mxu0 %v89
  %v133 = vpop.f32.mrf.mxu0
  %v134 = vadd.f32 0.0, %v133
  %v135 = vpop.f32.mrf.mxu0
  %v136 = vadd.f32 0.0, %v135
  %137 = vmatmul.bf16.gmra.mxu0 %v92
  %v138 = vpop.f32.mrf.mxu0
  %v139 = vadd.f32 0.0, %v138
  %v140 = vpop.f32.mrf.mxu0
  %v141 = vadd.f32 0.0, %v140
  %142 = vmatmul.bf16.gmra.mxu0 %v95
  %v143 = vpop.f32.mrf.mxu0
  %v144 = vadd.f32 0.0, %v143
  %v145 = vpop.f32.mrf.mxu0
  %v146 = vadd.f32 0.0, %v145
  %147 = vmatmul.bf16.gmra.mxu0 %v98
  %v148 = vpop.f32.mrf.mxu0
  %v149 = vadd.f32 0.0, %v148
  %v150 = vpop.f32.mrf.mxu0
  %v151 = vadd.f32 0.0, %v150
  %152 = vdwg.mxu0
  %v153 = vld [vmem:[%s2] sm:$0x1]
  %v155 = vperm.slane %v153, 0
  %v157 = vmul.f32 %v114, %v155
  %v158 = vmul.f32 %v116, %v155
  %v159 = vmul.f32 %v119, %v155
  %v160 = vmul.f32 %v121, %v155
  %v161 = vmul.f32 %v124, %v155
  %v162 = vmul.f32 %v126, %v155
  %v163 = vmul.f32 %v129, %v155
  %v164 = vmul.f32 %v131, %v155
  %v165 = vmul.f32 %v134, %v155
  %v166 = vmul.f32 %v136, %v155
  %v167 = vmul.f32 %v139, %v155
  %v168 = vmul.f32 %v141, %v155
  %v169 = vmul.f32 %v144, %v155
  %v170 = vmul.f32 %v146, %v155
  %v171 = vmul.f32 %v149, %v155
  %v172 = vmul.f32 %v151, %v155
  %v173 = vld [vmem:[%s3] sm:$0x1]
  %v175 = vperm.slane %v173, 0
  %v177 = vadd.f32 %v157, %v175
  %v178 = vadd.f32 %v158, %v175
  %v179 = vadd.f32 %v159, %v175
  %v180 = vadd.f32 %v160, %v175
  %v181 = vadd.f32 %v161, %v175
  %v182 = vadd.f32 %v162, %v175
  %v183 = vadd.f32 %v163, %v175
  %v184 = vadd.f32 %v164, %v175
  %v185 = vadd.f32 %v165, %v175
  %v186 = vadd.f32 %v166, %v175
  %v187 = vadd.f32 %v167, %v175
  %v188 = vadd.f32 %v168, %v175
  %v189 = vadd.f32 %v169, %v175
  %v190 = vadd.f32 %v170, %v175
  %v191 = vadd.f32 %v171, %v175
  %v192 = vadd.f32 %v172, %v175
  %vm193 = vcmp.gt.f32.partialorder %v177, 0.0
  %vm194 = vcmp.gt.f32.partialorder %v178, 0.0
  %vm195 = vcmp.gt.f32.partialorder %v179, 0.0
  %vm196 = vcmp.gt.f32.partialorder %v180, 0.0
  %vm197 = vcmp.gt.f32.partialorder %v181, 0.0
  %vm198 = vcmp.gt.f32.partialorder %v182, 0.0
  %vm199 = vcmp.gt.f32.partialorder %v183, 0.0
  %vm200 = vcmp.gt.f32.partialorder %v184, 0.0
  %vm201 = vcmp.gt.f32.partialorder %v185, 0.0
  %vm202 = vcmp.gt.f32.partialorder %v186, 0.0
  %vm203 = vcmp.gt.f32.partialorder %v187, 0.0
  %vm204 = vcmp.gt.f32.partialorder %v188, 0.0
  %vm205 = vcmp.gt.f32.partialorder %v189, 0.0
  %vm206 = vcmp.gt.f32.partialorder %v190, 0.0
  %vm207 = vcmp.gt.f32.partialorder %v191, 0.0
  %vm208 = vcmp.gt.f32.partialorder %v192, 0.0
  %v209 = vmul.f32 %v177, 1.442695
  %v210 = vpow.pop %v209
  %v211 = vmul.f32 %v178, 1.442695
  %v212 = vpow.pop %v211
  %v213 = vmul.f32 %v179, 1.442695
  %v214 = vpow.pop %v213
  %v215 = vmul.f32 %v180, 1.442695
  %v216 = vpow.pop %v215
  %v217 = vmul.f32 %v181, 1.442695
  %v218 = vpow.pop %v217
  %v219 = vmul.f32 %v182, 1.442695
  %v220 = vpow.pop %v219
  %v221 = vmul.f32 %v183, 1.442695
  %v222 = vpow.pop %v221
  %v223 = vmul.f32 %v184, 1.442695
  %v224 = vpow.pop %v223
  %v225 = vmul.f32 %v185, 1.442695
  %v226 = vpow.pop %v225
  %v227 = vmul.f32 %v186, 1.442695
  %v228 = vpow.pop %v227
  %v229 = vmul.f32 %v187, 1.442695
  %v230 = vpow.pop %v229
  %v231 = vmul.f32 %v188, 1.442695
  %v232 = vpow.pop %v231
  %v233 = vmul.f32 %v189, 1.442695
  %v234 = vpow.pop %v233
  %v235 = vmul.f32 %v190, 1.442695
  %v236 = vpow.pop %v235
  %v237 = vmul.f32 %v191, 1.442695
  %v238 = vpow.pop %v237
  %v239 = vmul.f32 %v192, 1.442695
  %v240 = vpow.pop %v239
  %v241 = vsub.f32 %v210, 1.0
  %v242 = vsub.f32 %v212, 1.0
  %v243 = vsub.f32 %v214, 1.0
  %v244 = vsub.f32 %v216, 1.0
  %v245 = vsub.f32 %v218, 1.0
  %v246 = vsub.f32 %v220, 1.0
  %v247 = vsub.f32 %v222, 1.0
  %v248 = vsub.f32 %v224, 1.0
  %v249 = vsub.f32 %v226, 1.0
  %v250 = vsub.f32 %v228, 1.0
  %v251 = vsub.f32 %v230, 1.0
  %v252 = vsub.f32 %v232, 1.0
  %v253 = vsub.f32 %v234, 1.0
  %v254 = vsub.f32 %v236, 1.0
  %v255 = vsub.f32 %v238, 1.0
  %v256 = vsub.f32 %v240, 1.0
  %v257 = vsel %vm193, %v177, %v241
  %v258 = vsel %vm194, %v178, %v242
  %v259 = vsel %vm195, %v179, %v243
  %v260 = vsel %vm196, %v180, %v244
  %v261 = vsel %vm197, %v181, %v245
  %v262 = vsel %vm198, %v182, %v246
  %v263 = vsel %vm199, %v183, %v247
  %v264 = vsel %vm200, %v184, %v248
  %v265 = vsel %vm201, %v185, %v249
  %v266 = vsel %vm202, %v186, %v250
  %v267 = vsel %vm203, %v187, %v251
  %v268 = vsel %vm204, %v188, %v252
  %v269 = vsel %vm205, %v189, %v253
  %v270 = vsel %vm206, %v190, %v254
  %v271 = vsel %vm207, %v191, %v255
  %v272 = vsel %vm208, %v192, %v256
  %vm273 = vcmask 261120
  %274 = vst.msk [vmem:[%s4] sm:$0xff] %vm273, %v257
  %275 = vst.msk [vmem:[%s4 + $0x8] sm:$0xff] %vm273, %v258
  %276 = vst.msk [vmem:[%s4 + $0x10] sm:$0xff] %vm273, %v259
  %277 = vst.msk [vmem:[%s4 + $0x18] sm:$0xff] %vm273, %v260
  %278 = vst.msk [vmem:[%s4 + $0x20] sm:$0xff] %vm273, %v261
  %279 = vst.msk [vmem:[%s4 + $0x28] sm:$0xff] %vm273, %v262
  %280 = vst.msk [vmem:[%s4 + $0x30] sm:$0xff] %vm273, %v263
  %281 = vst.msk [vmem:[%s4 + $0x38] sm:$0xff] %vm273, %v264
  %282 = vst.msk [vmem:[%s4 + $0x40] sm:$0xff] %vm273, %v265
  %283 = vst.msk [vmem:[%s4 + $0x48] sm:$0xff] %vm273, %v266
  %284 = vst.msk [vmem:[%s4 + $0x50] sm:$0xff] %vm273, %v267
  %285 = vst.msk [vmem:[%s4 + $0x58] sm:$0xff] %vm273, %v268
  %286 = vst.msk [vmem:[%s4 + $0x60] sm:$0xff] %vm273, %v269
  %287 = vst.msk [vmem:[%s4 + $0x68] sm:$0xff] %vm273, %v270
  %288 = vst.msk [vmem:[%s4 + $0x70] sm:$0xff] %vm273, %v271
  %289 = vst.msk [vmem:[%s4 + $0x78] sm:$0xff] %vm273, %v272
  // Predicated region
  $region18: #{tpu_custom_call.1} parent=0 // pred_check
    _
  $region19: #{tpu_custom_call.1} parent=0 // pred_check_branch
    %291 = sbr.rel (0) target = $region21
  $region20: #{tpu_custom_call.1} parent=0 // pred_region
    _
  $region21: #{tpu_custom_call.1} parent=0 // pred_fallthru
    _
  // Predicated region
  $region22: #{tpu_custom_call.1} parent=0 // pred_check
    _
  $region23: #{tpu_custom_call.1} parent=0 // pred_check_branch
    %293 = sbr.rel (0) target = $region25
  $region24: #{tpu_custom_call.1} parent=0 // pred_region
    _
  $region25: #{tpu_custom_call.1} parent=0 // pred_fallthru
    _

</llo_original>
